<compile_context>
chip_gen: v5e
topology: v5e:2x2
jax: 0.10.0
libtpu: 0.0.40
codegen_flags: <defaults>
</compile_context>

<pallas_src>
import functools

import jax
import jax.numpy as jnp
from jax import lax
from jax.experimental import pallas as pl
from jax.experimental.pallas import tpu as pltpu

EPS = 1e-5


def _round_up(x, m):
    return ((x + m - 1) // m) * m


def _sublane_multiple(dtype):
    itemsize = jnp.dtype(dtype).itemsize
    if itemsize >= 4:
        return 8
    if itemsize == 2:
        return 16
    return 32


def _vmem_capacity_bytes():
    try:
        info = pltpu.get_tpu_info()
        cap = getattr(info, "vmem_capacity_bytes", None)
        if cap:
            return int(cap)
    except Exception:
        pass
    return 64 * 1024 * 1024   # conservative fallback: v7x per-TC VMEM


def prenorm_kernel(x_ref, gamma_ref, beta_ref, w_ref, b_ref, o_ref, y_ref):
    # Grid: (row tiles, dim_out tiles).
    # x_ref:      (tile_m, dim)      same block for all j (no re-DMA)
    # gamma/beta: (1, dim)           grid-invariant, single-buffered
    # w_ref:      (dim, tile_n)      varies with j -> double-buffered DMA
    # b_ref:      (1, tile_n)
    # o_ref:      (tile_m, tile_n)
    # y_ref:      VMEM scratch (tile_m, dim) in the matmul (weight) dtype

    @pl.when(pl.program_id(1) == 0)
    def _():
        x = x_ref[...].astype(jnp.float32)
        # two-pass (center-then-square) statistics in f32 (torch LayerNorm,
        # biased variance); robust to large activation offsets.
        mean = jnp.mean(x, axis=-1, keepdims=True)
        xc = x - mean
        var = jnp.mean(xc * xc, axis=-1, keepdims=True)
        x_hat = xc * lax.rsqrt(var + EPS)
        y = (x_hat * gamma_ref[...].astype(jnp.float32)
             + beta_ref[...].astype(jnp.float32))
        y_ref[...] = y.astype(y_ref.dtype)

    # fn: Linear(dim -> dim_out) tile on the MXU; operands in the weight dtype
    # (bf16 stays bf16), f32 accumulation.
    out = jnp.dot(y_ref[...], w_ref[...], preferred_element_type=jnp.float32)
    out = out + b_ref[...].astype(jnp.float32)
    o_ref[...] = out.astype(o_ref.dtype)


def prepare_prenorm_params(gamma, beta, w, b, *, tile_n_max=512):
    """Pad Linear params to the lane multiple ONCE, outside the jitted path."""
    dim, dim_out = w.shape
    dim_out_p = _round_up(dim_out, 128)

    # Largest N tile <= tile_n_max that is a 128-multiple and divides dim_out_p
    # (prefers >=256 for the 256-wide v6e/v7x MXU; 128 always works).
    tile_n_max = max(128, (tile_n_max // 128) * 128)
    tile_n = 128
    for cand in range(tile_n_max, 127, -128):
        if dim_out_p % cand == 0:
            tile_n = cand
            break

    if dim_out_p != dim_out:
        w = jnp.pad(w, ((0, 0), (0, dim_out_p - dim_out)))
        b = jnp.pad(b, (0, dim_out_p - dim_out))

    return dict(gamma=gamma.reshape(1, dim),
                beta=beta.reshape(1, dim),
                w=w,
                b=b.reshape(1, dim_out_p),
                dim_out=dim_out,
                tile_n=tile_n)


@functools.partial(jax.jit, static_argnames=("dim_out", "tile_n", "tile_rows"))
def prenorm_forward(x, gamma, beta, w, b, *, dim_out, tile_n, tile_rows=None):
    """x: [batch, seq, dim] -> [batch, seq, dim_out].  w/b pre-padded."""
    batch, seq, dim = x.shape
    dim_out_p = w.shape[1]
    rows = batch * seq
    x2d = x.reshape(rows, dim)

    x_bytes = jnp.dtype(x.dtype).itemsize
    w_bytes = jnp.dtype(w.dtype).itemsize
    p_bytes = jnp.dtype(gamma.dtype).itemsize

    vmem_cap = _vmem_capacity_bytes()
    vmem_budget = int(0.85 * vmem_cap)      # leave headroom for compiler scratch

    sub = _sublane_multiple(x.dtype)        # 8 f32 / 16 bf16 / 32 int8-fp8
    if tile_rows is None:
        # Big tiles where VMEM is plentiful (v5e/v6e 128 MiB), moderate on v7x.
        tile_rows = 512 if vmem_cap >= (96 << 20) else 256

    tile_m = min(tile_rows, _round_up(rows, sub))
    tile_m = _round_up(tile_m, sub)

    def vmem_need(tm):
        return (2 * tm * dim * x_bytes              # x tile (double-buffered)
                + tm * dim * w_bytes                # y scratch
                + 2 * dim * tile_n * w_bytes        # W tile (double-buffered)
                + 2 * tile_n * w_bytes              # bias tile
                + 2 * dim * p_bytes                 # gamma + beta
                + 2 * tm * tile_n * x_bytes)        # out tile (double-buffered)

    # Shrink the row tile until the footprint fits this generation's VMEM.
    while vmem_need(tile_m) > vmem_budget and tile_m > sub:
        tile_m = max(sub, _round_up(tile_m // 2, sub))

    # Ensure >= 2 row steps so a v7x megacore can shard the "parallel" axis.
    if _round_up(rows, tile_m) // tile_m < 2 and tile_m > sub:
        tile_m = max(sub, _round_up(tile_m // 2, sub))

    rows_p = _round_up(rows, tile_m)
    if rows_p != rows:
        x2d = jnp.pad(x2d, ((0, rows_p - rows), (0, 0)))

    grid = (rows_p // tile_m, dim_out_p // tile_n)

    vmem_limit = int(min(max(int(1.25 * vmem_need(tile_m)), 32 << 20),
                         vmem_budget))

    cost = pl.CostEstimate(
        flops=2 * rows_p * dim * dim_out_p + 10 * rows_p * dim,
        transcendentals=rows_p,
        bytes_accessed=(rows_p * dim * x_bytes            # x read
                        + rows_p * dim_out_p * x_bytes    # out write
                        + dim * dim_out_p * w_bytes       # W read
                        + dim_out_p * w_bytes             # bias read
                        + 2 * dim * p_bytes),             # gamma/beta read
    )

    invariant = pl.Buffered(1)   # grid-invariant blocks: no double-buffering

    out2d = pl.pallas_call(
        prenorm_kernel,
        out_shape=jax.ShapeDtypeStruct((rows_p, dim_out_p), x.dtype),
        grid_spec=pltpu.PrefetchScalarGridSpec(
            num_scalar_prefetch=0,
            grid=grid,
            in_specs=[
                pl.BlockSpec((tile_m, dim), lambda i, j: (i, 0)),     # x tile
                pl.BlockSpec((1, dim), lambda i, j: (0, 0),
                             pipeline_mode=invariant),                # gamma
                pl.BlockSpec((1, dim), lambda i, j: (0, 0),
                             pipeline_mode=invariant),                # beta
                pl.BlockSpec((dim, tile_n), lambda i, j: (0, j)),     # W tile
                pl.BlockSpec((1, tile_n), lambda i, j: (0, j)),       # bias tile
            ],
            out_specs=pl.BlockSpec((tile_m, tile_n), lambda i, j: (i, j)),
            scratch_shapes=[pltpu.VMEM((tile_m, dim), w.dtype)],      # y cache
        ),
        compiler_params=pltpu.CompilerParams(
            dimension_semantics=("parallel", "arbitrary"),
            vmem_limit_bytes=vmem_limit),
        cost_estimate=cost,
    )(x2d, gamma, beta, w, b)

    # Strip row / lane padding and restore [batch, seq, dim_out].
    return out2d[:rows, :dim_out].reshape(batch, seq, dim_out)


def prenorm_reference(x, gamma, beta, w, b):
    xf = x.astype(jnp.float32)
    mean = jnp.mean(xf, axis=-1, keepdims=True)
    var = jnp.mean((xf - mean) ** 2, axis=-1, keepdims=True)
    y = (xf - mean) / jnp.sqrt(var + EPS) * gamma.reshape(1, 1, -1) \
        + beta.reshape(1, 1, -1)
    out = y @ w.astype(jnp.float32) + b.reshape(1, 1, -1).astype(jnp.float32)
    return out.astype(x.dtype)


if __name__ == "__main__":
    key = jax.random.PRNGKey(0)
    batch, seq, dim, dim_out = 2, 8, 32, 32

    kx, kw, kb = jax.random.split(key, 3)
    x = jax.random.normal(kx, (batch, seq, dim), dtype=jnp.float32)

    # LayerNorm params: PyTorch default init (weight=1, bias=0).
    gamma = jnp.ones((dim,), dtype=jnp.float32)
    beta = jnp.zeros((dim,), dtype=jnp.float32)

    # fn = Linear(dim, dim_out): deterministic random init.
    # TODO(synk): `fn` is an arbitrary callable in the PyTorch PreNorm; only the
    # canonical Linear instantiation is fused here.
    w = jax.random.normal(kw, (dim, dim_out), dtype=jnp.float32) * 0.02
    b = jax.random.normal(kb, (dim_out,), dtype=jnp.float32) * 0.01

    params = prepare_prenorm_params(gamma, beta, w, b)
    out = prenorm_forward(x, params["gamma"], params["beta"],
                          params["w"], params["b"],
                          dim_out=params["dim_out"], tile_n=params["tile_n"])
    out = jax.block_until_ready(out)

    ref = prenorm_reference(x, gamma, beta, w, b)
    assert out.shape == (batch, seq, dim_out)
    assert jnp.allclose(out, ref, atol=1e-4, rtol=1e-4), "mismatch vs reference"

    print("KERNEL_OK")
</pallas_src>

<mosaic_0001>
module attributes {stable_mosaic.version = 11 : i64} {
  func.func @prenorm_kernel(%arg0: i32, %arg1: i32, %arg2: memref<8x32xf32, #tpu.memory_space<vmem>>, %arg3: memref<1x32xf32, #tpu.memory_space<vmem>>, %arg4: memref<1x32xf32, #tpu.memory_space<vmem>>, %arg5: memref<32x128xf32, #tpu.memory_space<vmem>>, %arg6: memref<1x128xf32, #tpu.memory_space<vmem>>, %arg7: memref<8x128xf32, #tpu.memory_space<vmem>>, %arg8: memref<8x32xf32, #tpu.memory_space<vmem>>) attributes {dimension_semantics = [#tpu.dimension_semantics<parallel>, #tpu.dimension_semantics<arbitrary>], iteration_bounds = array<i64: 2, 1>, scalar_prefetch = 0 : i64, scratch_operands = 1 : i64, tpu.core_type = #tpu.core_type<tc>, window_params = [{transform_indices = @transform_0, window_bounds = array<i64: 8, 32>}, {pipeline_mode = #tpu.pipeline_mode<synchronous>, transform_indices = @transform_1, window_bounds = array<i64: 1, 32>}, {pipeline_mode = #tpu.pipeline_mode<synchronous>, transform_indices = @transform_2, window_bounds = array<i64: 1, 32>}, {transform_indices = @transform_3, window_bounds = array<i64: 32, 128>}, {transform_indices = @transform_4, window_bounds = array<i64: 1, 128>}, {transform_indices = @transform_5, window_bounds = array<i64: 8, 128>}]} {
    %c0_i32 = arith.constant 0 : i32
    %0 = arith.cmpi eq, %arg1, %c0_i32 : i32
    %1 = arith.extui %0 : i1 to i32
    %c0_i32_0 = arith.constant 0 : i32
    %2 = arith.cmpi ne, %1, %c0_i32_0 : i32
    scf.if %2 {
      %c0_8 = arith.constant 0 : index
      %c0_9 = arith.constant 0 : index
      %10 = vector.load %arg2[%c0_8, %c0_9] : memref<8x32xf32, #tpu.memory_space<vmem>>, vector<8x32xf32>
      %cst_10 = arith.constant dense<0.000000e+00> : vector<8xf32>
      %11 = vector.multi_reduction <add>, %10, %cst_10 [1] : vector<8x32xf32> to vector<8xf32>
      %12 = vector.shape_cast %11 : vector<8xf32> to vector<8x1xf32>
      %cst_11 = arith.constant 3.200000e+01 : f32
      %13 = vector.broadcast %cst_11 : f32 to vector<8x1xf32>
      %14 = arith.divf %12, %13 : vector<8x1xf32>
      %15 = vector.broadcast %14 : vector<8x1xf32> to vector<8x32xf32>
      %16 = arith.subf %10, %15 : vector<8x32xf32>
      %17 = arith.mulf %16, %16 : vector<8x32xf32>
      %cst_12 = arith.constant dense<0.000000e+00> : vector<8xf32>
      %18 = vector.multi_reduction <add>, %17, %cst_12 [1] : vector<8x32xf32> to vector<8xf32>
      %19 = vector.shape_cast %18 : vector<8xf32> to vector<8x1xf32>
      %cst_13 = arith.constant 3.200000e+01 : f32
      %20 = vector.broadcast %cst_13 : f32 to vector<8x1xf32>
      %21 = arith.divf %19, %20 : vector<8x1xf32>
      %cst_14 = arith.constant 9.99999974E-6 : f32
      %22 = vector.broadcast %cst_14 : f32 to vector<8x1xf32>
      %23 = arith.addf %21, %22 : vector<8x1xf32>
      %24 = math.rsqrt %23 : vector<8x1xf32>
      %25 = vector.broadcast %24 : vector<8x1xf32> to vector<8x32xf32>
      %26 = arith.mulf %16, %25 : vector<8x32xf32>
      %c0_15 = arith.constant 0 : index
      %c0_16 = arith.constant 0 : index
      %27 = vector.load %arg3[%c0_15, %c0_16] : memref<1x32xf32, #tpu.memory_space<vmem>>, vector<1x32xf32>
      %28 = vector.broadcast %27 : vector<1x32xf32> to vector<8x32xf32>
      %29 = arith.mulf %26, %28 : vector<8x32xf32>
      %c0_17 = arith.constant 0 : index
      %c0_18 = arith.constant 0 : index
      %30 = vector.load %arg4[%c0_17, %c0_18] : memref<1x32xf32, #tpu.memory_space<vmem>>, vector<1x32xf32>
      %31 = vector.broadcast %30 : vector<1x32xf32> to vector<8x32xf32>
      %32 = arith.addf %29, %31 : vector<8x32xf32>
      %c0_19 = arith.constant 0 : index
      %c0_20 = arith.constant 0 : index
      %33 = vector.load %arg8[%c0_19, %c0_20] : memref<8x32xf32, #tpu.memory_space<vmem>>, vector<8x32xf32>
      tpu.vector_store %arg8[%c0_19, %c0_20], %32 {strides = array<i32>} : memref<8x32xf32, #tpu.memory_space<vmem>>, vector<8x32xf32>,
    } else {
    }
    %c0 = arith.constant 0 : index
    %c0_1 = arith.constant 0 : index
    %3 = vector.load %arg8[%c0, %c0_1] : memref<8x32xf32, #tpu.memory_space<vmem>>, vector<8x32xf32>
    %c0_2 = arith.constant 0 : index
    %c0_3 = arith.constant 0 : index
    %4 = vector.load %arg5[%c0_2, %c0_3] : memref<32x128xf32, #tpu.memory_space<vmem>>, vector<32x128xf32>
    %cst = arith.constant dense<0.000000e+00> : vector<8x128xf32>
    %5 = tpu.matmul %3, %4, %cst {dimension_numbers = #tpu.dot_dimension_numbers<[1], [0], [0], [1], [0, 0, 1, 1], [], []>} : vector<8x32xf32>, vector<32x128xf32>, vector<8x128xf32> -> vector<8x128xf32>
    %c0_4 = arith.constant 0 : index
    %c0_5 = arith.constant 0 : index
    %6 = vector.load %arg6[%c0_4, %c0_5] : memref<1x128xf32, #tpu.memory_space<vmem>>, vector<1x128xf32>
    %7 = vector.broadcast %6 : vector<1x128xf32> to vector<8x128xf32>
    %8 = arith.addf %5, %7 : vector<8x128xf32>
    %c0_6 = arith.constant 0 : index
    %c0_7 = arith.constant 0 : index
    %9 = vector.load %arg7[%c0_6, %c0_7] : memref<8x128xf32, #tpu.memory_space<vmem>>, vector<8x128xf32>
    tpu.vector_store %arg7[%c0_6, %c0_7], %8 {strides = array<i32>} : memref<8x128xf32, #tpu.memory_space<vmem>>, vector<8x128xf32>,
    return
  }
  func.func @transform_0(%arg0: i32, %arg1: i32) -> (i32, i32) {
    %c0_i32 = arith.constant 0 : i32
    %c0_i32_0 = arith.constant 0 : i32
    return %arg0, %c0_i32 : i32, i32
  }
  func.func @transform_1(%arg0: i32, %arg1: i32) -> (i32, i32) {
    %c0_i32 = arith.constant 0 : i32
    %c0_i32_0 = arith.constant 0 : i32
    %c0_i32_1 = arith.constant 0 : i32
    return %c0_i32, %c0_i32_0 : i32, i32
  }
  func.func @transform_2(%arg0: i32, %arg1: i32) -> (i32, i32) {
    %c0_i32 = arith.constant 0 : i32
    %c0_i32_0 = arith.constant 0 : i32
    %c0_i32_1 = arith.constant 0 : i32
    return %c0_i32, %c0_i32_0 : i32, i32
  }
  func.func @transform_3(%arg0: i32, %arg1: i32) -> (i32, i32) {
    %c0_i32 = arith.constant 0 : i32
    %c0_i32_0 = arith.constant 0 : i32
    return %c0_i32, %arg1 : i32, i32
  }
  func.func @transform_4(%arg0: i32, %arg1: i32) -> (i32, i32) {
    %c0_i32 = arith.constant 0 : i32
    %c0_i32_0 = arith.constant 0 : i32
    return %c0_i32, %arg1 : i32, i32
  }
  func.func @transform_5(%arg0: i32, %arg1: i32) -> (i32, i32) {
    %c0_i32 = arith.constant 0 : i32
    return %arg0, %arg1 : i32, i32
  }
}

</mosaic_0001>

<llo_original>
// kernel: prenorm_forward.1
$region0: #{prenorm_forward.1}
  #allocation0 [shape = 'u32[]', space=smem, size = 0x4, offset = 0x4, fixed_abs, tag = 'smem constant byte address 0x4 - core index']
  #allocation1 [shape = 'u32[72,128]{1,0:T(1,128)}', space=vmem, size = 0x9000, scoped, tag = 'internal scratch']
  #allocation2 [shape = 'f32[8,32]{1,0:T(8,128)}', space=vmem, size = 0x1000, scoped, tag = 'scratch operand']
  %s0 = inlined_call_operand.hbm [shape: f32[16,32], index: 0, kind: input, shape index: {}]
  %s1 = inlined_call_operand.vmem [shape: f32[1,32], index: 1, kind: input, shape index: {}]
  %s2 = inlined_call_operand.vmem [shape: f32[1,32], index: 2, kind: input, shape index: {}]
  %s3 = inlined_call_operand.hbm [shape: f32[32,128], index: 3, kind: input, shape index: {}]
  %s4 = inlined_call_operand.vmem [shape: f32[1,128], index: 4, kind: input, shape index: {}]
  %s5 = inlined_call_operand.vmem [shape: f32[16,128], index: 5, kind: output, shape index: {}]
  %s6 = sld [smem:[#allocation0]]
  $region65: #{prenorm_forward.1} parent=0
    _
  %s8 = ssub.s32 1, %s6
  %s9 = scalar_select 0, %s8, %s6
  $region1: #{prenorm_forward.1} parent=0
    #allocation3 [shape = 'u8[8192]{0}', space=vmem, size = 0x2000, scoped, tag = 'input window, operand 0']
    #allocation4 [shape = 's32[2]{0}', space=sflag, size = 0x8, scoped, tag = 'scoped memory for prenorm_forward.1']
    #allocation5 [shape = 'u8[16384]{0}', space=vmem, size = 0x4000, scoped, tag = 'input window, operand 3, single buffered']
    #allocation6 [shape = 's32[1]{0}', space=sflag, size = 0x4, scoped, tag = 'scoped memory for prenorm_forward.1']
    %10 = vsyncpa [#allocation4], 0
    %s11 = scalar_lea.sflag [#allocation4], 1
    %12 = vsyncpa %s11, 0
    %13 = vsyncpa [#allocation6], 0
    loop: start=0, step=1, limit=4
    $region2: #{prenorm_forward.1} parent=1 // loop_pre_header
      _
    $region3: #{prenorm_forward.1} parent=1 // loop_header
      %s15 = sphi 0, %s19
      %p16 = scmp.ge.s32.totalorder %s15, 4
      %s22 = sphi 0, %s34
      %s23 = sphi 0, %s30
      %s24 = sphi 0, %s22
      %s25 = sphi 0, %s23
      %s26 = sphi 0, %s24
      %s27 = sphi 0, %s25
      %s37 = sphi 0, %s39
      %s40 = sphi 0, %s37
      %s41 = sphi 0, %s40
      %s57 = sphi 0, %s41
      %s61 = sphi 0, %s61
      %s63 = sphi 0, %s61
      %s64 = sphi 0, %s63
      %s78 = sphi 0, %s64
      %s82 = sphi 0, %s82
      %s84 = sphi 0, %s82
      %s85 = sphi 0, %s84
      %s99 = sphi 0, %s85
      %s105 = sphi 0, %s107
      %s108 = sphi 0, %s105
      %s109 = sphi 0, %s108
      %s125 = sphi 0, %s109
      %s131 = sphi 0, %s133
      %s134 = sphi 0, %s131
      %s135 = sphi 0, %s134
      %s151 = sphi 0, %s135
      %s159 = sphi 0, %s161
      %s162 = sphi 0, %s159
      %s163 = sphi 0, %s162
      %s179 = sphi 0, %s163
    $region4: #{prenorm_forward.1} parent=1 // loop_header_branch
      %18 = sbr.rel (%p16) target = $region8
    $region5: #{prenorm_forward.1} parent=1 // loop_body
      %s20 = ssub.s32 %s15, 1
      %s21 = ssub.s32 %s15, 2
      %s28 = sadd.s32 1, %s23
      %p29 = scmp.ge.s32.totalorder %s28, 1
      %s30 = scalar_select %p29, 0, %s28
      %s31 = sadd.s32 1, %s22
      %s32 = scalar_select %p29, %s31, %s22
      %p33 = scmp.ge.s32.totalorder %s32, 2
      %s34 = scalar_select %p33, 0, %s32
      %s35 = ssub.s32 %s22, %s34
      %p36 = scmp.eq.s32.totalorder %s35, 0
      %s38 = sadd.s32 %s37, 1
      %s39 = scalar_select %p36, %s37, %s38
      %p42 = pneg %p36
      %p43 = scmp.eq.s32.totalorder %s15, 1
      %p44 = por %p42, %p43
      %p45 = scmp.ne.s32.totalorder %s37, %s40
      %p46 = scmp.eq.s32.totalorder %s15, 0
      %p47 = por %p45, %p46
      %p48 = scmp.ne.s32.totalorder %s37, %s40
      %p49 = scmp.eq.s32.totalorder %s20, 1
      %p50 = por %p48, %p49
      %p51 = scmp.ne.s32.totalorder %s40, %s41
      %p52 = scmp.eq.s32.totalorder %s20, 0
      %p53 = por %p51, %p52
      %p54 = scmp.ne.s32.totalorder %s40, %s41
      %p55 = scmp.eq.s32.totalorder %s21, 1
      %p56 = por %p54, %p55
      %p58 = scmp.ne.s32.totalorder %s41, %s57
      %p59 = scmp.eq.s32.totalorder %s21, 0
      %p60 = por %p58, %p59
      %s62 = sadd.s32 %s61, 1
      %p65 = scmp.eq.s32.totalorder %s15, 1
      %p66 = scmp.ne.s32.totalorder %s61, %s63
      %p67 = scmp.eq.s32.totalorder %s15, 0
      %p68 = por %p66, %p67
      %p69 = scmp.ne.s32.totalorder %s61, %s63
      %p70 = scmp.eq.s32.totalorder %s20, 1
      %p71 = por %p69, %p70
      %p72 = scmp.ne.s32.totalorder %s63, %s64
      %p73 = scmp.eq.s32.totalorder %s20, 0
      %p74 = por %p72, %p73
      %p75 = scmp.ne.s32.totalorder %s63, %s64
      %p76 = scmp.eq.s32.totalorder %s21, 1
      %p77 = por %p75, %p76
      %p79 = scmp.ne.s32.totalorder %s64, %s78
      %p80 = scmp.eq.s32.totalorder %s21, 0
      %p81 = por %p79, %p80
      %s83 = sadd.s32 %s82, 1
      %p86 = scmp.eq.s32.totalorder %s15, 1
      %p87 = scmp.ne.s32.totalorder %s82, %s84
      %p88 = scmp.eq.s32.totalorder %s15, 0
      %p89 = por %p87, %p88
      %p90 = scmp.ne.s32.totalorder %s82, %s84
      %p91 = scmp.eq.s32.totalorder %s20, 1
      %p92 = por %p90, %p91
      %p93 = scmp.ne.s32.totalorder %s84, %s85
      %p94 = scmp.eq.s32.totalorder %s20, 0
      %p95 = por %p93, %p94
      %p96 = scmp.ne.s32.totalorder %s84, %s85
      %p97 = scmp.eq.s32.totalorder %s21, 1
      %p98 = por %p96, %p97
      %p100 = scmp.ne.s32.totalorder %s85, %s99
      %p101 = scmp.eq.s32.totalorder %s21, 0
      %p102 = por %p100, %p101
      %s103 = ssub.s32 %s23, %s30
      %p104 = scmp.eq.s32.totalorder %s103, 0
      %s106 = sadd.s32 %s105, 1
      %s107 = scalar_select %p104, %s105, %s106
      %p110 = pneg %p104
      %p111 = scmp.eq.s32.totalorder %s15, 1
      %p112 = por %p110, %p111
      %p113 = scmp.ne.s32.totalorder %s105, %s108
      %p114 = scmp.eq.s32.totalorder %s15, 0
      %p115 = por %p113, %p114
      %p116 = scmp.ne.s32.totalorder %s105, %s108
      %p117 = scmp.eq.s32.totalorder %s20, 1
      %p118 = por %p116, %p117
      %p119 = scmp.ne.s32.totalorder %s108, %s109
      %p120 = scmp.eq.s32.totalorder %s20, 0
      %p121 = por %p119, %p120
      %p122 = scmp.ne.s32.totalorder %s108, %s109
      %p123 = scmp.eq.s32.totalorder %s21, 1
      %p124 = por %p122, %p123
      %p126 = scmp.ne.s32.totalorder %s109, %s125
      %p127 = scmp.eq.s32.totalorder %s21, 0
      %p128 = por %p126, %p127
      %s129 = ssub.s32 %s23, %s30
      %p130 = scmp.eq.s32.totalorder %s129, 0
      %s132 = sadd.s32 %s131, 1
      %s133 = scalar_select %p130, %s131, %s132
      %p136 = pneg %p130
      %p137 = scmp.eq.s32.totalorder %s15, 1
      %p138 = por %p136, %p137
      %p139 = scmp.ne.s32.totalorder %s131, %s134
      %p140 = scmp.eq.s32.totalorder %s15, 0
      %p141 = por %p139, %p140
      %p142 = scmp.ne.s32.totalorder %s131, %s134
      %p143 = scmp.eq.s32.totalorder %s20, 1
      %p144 = por %p142, %p143
      %p145 = scmp.ne.s32.totalorder %s134, %s135
      %p146 = scmp.eq.s32.totalorder %s20, 0
      %p147 = por %p145, %p146
      %p148 = scmp.ne.s32.totalorder %s134, %s135
      %p149 = scmp.eq.s32.totalorder %s21, 1
      %p150 = por %p148, %p149
      %p152 = scmp.ne.s32.totalorder %s135, %s151
      %p153 = scmp.eq.s32.totalorder %s21, 0
      %p154 = por %p152, %p153
      %s155 = ssub.s32 %s22, %s34
      %s156 = ssub.s32 %s23, %s30
      %s157 = sor.u32 %s155, %s156
      %p158 = scmp.eq.s32.totalorder %s157, 0
      %s160 = sadd.s32 %s159, 1
      %s161 = scalar_select %p158, %s159, %s160
      %p164 = pneg %p158
      %p165 = scmp.eq.s32.totalorder %s15, 1
      %p166 = por %p164, %p165
      %p167 = scmp.ne.s32.totalorder %s159, %s162
      %p168 = scmp.eq.s32.totalorder %s15, 0
      %p169 = por %p167, %p168
      %p170 = scmp.ne.s32.totalorder %s159, %s162
      %p171 = scmp.eq.s32.totalorder %s20, 1
      %p172 = por %p170, %p171
      %p173 = scmp.ne.s32.totalorder %s162, %s163
      %p174 = scmp.eq.s32.totalorder %s20, 0
      %p175 = por %p173, %p174
      %p176 = scmp.ne.s32.totalorder %s162, %s163
      %p177 = scmp.eq.s32.totalorder %s21, 1
      %p178 = por %p176, %p177
      %p180 = scmp.ne.s32.totalorder %s163, %s179
      %p181 = scmp.eq.s32.totalorder %s21, 0
      %p182 = por %p180, %p181
      %p183 = scmp.le.s32.totalorder 1, %s15
      %p184 = scmp.lt.s32.totalorder %s15, 3
      %p185 = pnand %p183, %p184
      %p186 = pneg %p185
      // Predicated region
      $region9: #{prenorm_forward.1} parent=5 // pred_check
        _
      $region10: #{prenorm_forward.1} parent=5 // pred_check_branch
        %188 = sbr.rel (%p185) target = $region12
      $region11: #{prenorm_forward.1} parent=5 // pred_region
        %s189 = ssub.s32 %s15, 1
        // Predicated region
        $region13: #{prenorm_forward.1} parent=11 // pred_check
          %p190 = pneg %p74
        $region14: #{prenorm_forward.1} parent=11 // pred_check_branch
          %192 = sbr.rel (%p190) target = $region16
        $region15: #{prenorm_forward.1} parent=11 // pred_region
          _
        $region16: #{prenorm_forward.1} parent=11 // pred_fallthru
          _
        // Predicated region
        $region17: #{prenorm_forward.1} parent=11 // pred_check
          %p193 = pneg %p95
        $region18: #{prenorm_forward.1} parent=11 // pred_check_branch
          %195 = sbr.rel (%p193) target = $region20
        $region19: #{prenorm_forward.1} parent=11 // pred_region
          _
        $region20: #{prenorm_forward.1} parent=11 // pred_fallthru
          _
        // Predicated region
        $region21: #{prenorm_forward.1} parent=11 // pred_check
          %p196 = pneg %p121
        $region22: #{prenorm_forward.1} parent=11 // pred_check_branch
          %198 = sbr.rel (%p196) target = $region24
        $region23: #{prenorm_forward.1} parent=11 // pred_region
          %200 = vsyncadd [#allocation6], 0
          %s201 = smul.addr %s25, 8
          %s202 = scalar_lea.hbm %s3, %s201
          %s203 = sshll.u32 %s202, 4
          %s204 = int_to_ptr.hbm [resolvable:$true] %s203
          %s205 = sshll.u32 [#allocation5], 4
          %s206 = int_to_ptr.vmem [resolvable:$true] %s205
          %211 = dma.hbm_to_vmem [thread:$0]  %s204, 512, %s206, [#allocation6], 128, 128, 8
        $region24: #{prenorm_forward.1} parent=11 // pred_fallthru
          _
        // Predicated region
        $region25: #{prenorm_forward.1} parent=11 // pred_check
          %p212 = pneg %p147
        $region26: #{prenorm_forward.1} parent=11 // pred_check_branch
          %214 = sbr.rel (%p212) target = $region28
        $region27: #{prenorm_forward.1} parent=11 // pred_region
          %p215 = scmp.lt.s32.totalorder %s25, 0
          %s216 = scalar_select %p215, %s25, 0
          %s217 = scalar_lea.vmem %s4, %s216
        $region28: #{prenorm_forward.1} parent=11 // pred_fallthru
          _
      $region12: #{prenorm_forward.1} parent=5 // pred_fallthru
        _
      %p218 = scmp.lt.s32.totalorder %s15, 2
      // Predicated region
      $region29: #{prenorm_forward.1} parent=5 // pred_check
        %p219 = pneg %p218
      $region30: #{prenorm_forward.1} parent=5 // pred_check_branch
        %221 = sbr.rel (%p219) target = $region32
      $region31: #{prenorm_forward.1} parent=5 // pred_region
        // Predicated region
        $region33: #{prenorm_forward.1} parent=31 // pred_check
          %p222 = pneg %p47
        $region34: #{prenorm_forward.1} parent=31 // pred_check_branch
          %224 = sbr.rel (%p222) target = $region36
        $region35: #{prenorm_forward.1} parent=31 // pred_region
          %s225 = sand.u32 %s37, 1
          %s226 = scalar_lea.sflag [#allocation4], %s225
          %s227 = sand.u32 %s37, 1
          %s228 = smul.addr %s227, 8
          %s229 = scalar_lea.vmem [#allocation3], %s228
          %231 = vsyncadd %s226, 0
          %s232 = smul.addr %s22, 8
          %s233 = scalar_lea.hbm %s0, %s232
          %s235 = sshll.u32 %s233, 4
          %s236 = int_to_ptr.hbm [resolvable:$true] %s235
          %s237 = sshll.u32 %s229, 4
          %s238 = int_to_ptr.vmem [resolvable:$true] %s237
          %240 = dma.hbm_to_vmem [thread:$0]  %s236, 128, %s238, %s226
        $region36: #{prenorm_forward.1} parent=31 // pred_fallthru
          _
      $region32: #{prenorm_forward.1} parent=5 // pred_fallthru
        _
      %p241 = scmp.le.s32.totalorder 1, %s15
      %p242 = scmp.lt.s32.totalorder %s15, 3
      %p243 = pnand %p241, %p242
      %p244 = pneg %p243
      // Predicated region
      $region37: #{prenorm_forward.1} parent=5 // pred_check
        _
      $region38: #{prenorm_forward.1} parent=5 // pred_check_branch
        %246 = sbr.rel (%p243) target = $region40
      $region39: #{prenorm_forward.1} parent=5 // pred_region
        %s247 = ssub.s32 %s15, 1
        %s248 = sand.u32 %s40, 1
        %s249 = scalar_lea.sflag [#allocation4], %s248
        %s250 = sand.u32 %s40, 1
        %s251 = smul.addr %s250, 8
        %s252 = scalar_lea.vmem [#allocation3], %s251
        // Predicated region
        $region41: #{prenorm_forward.1} parent=39 // pred_check
          %p253 = pneg %p53
        $region42: #{prenorm_forward.1} parent=39 // pred_check_branch
          %255 = sbr.rel (%p253) target = $region44
        $region43: #{prenorm_forward.1} parent=39 // pred_region
          %257 = dma.done %s249, 128
        $region44: #{prenorm_forward.1} parent=39 // pred_fallthru
          _
        // Predicated region
        $region45: #{prenorm_forward.1} parent=39 // pred_check
          %p258 = pneg %p121
        $region46: #{prenorm_forward.1} parent=39 // pred_check_branch
          %260 = sbr.rel (%p258) target = $region48
        $region47: #{prenorm_forward.1} parent=39 // pred_region
          %262 = dma.done [#allocation6], 512
        $region48: #{prenorm_forward.1} parent=39 // pred_fallthru
          _
        %s263 = sand.u32 %s40, 1
        %s264 = scalar_lea.sflag [#allocation4], %s263
        %s265 = sand.u32 %s40, 1
        %s266 = smul.addr %s265, 8
        %s267 = scalar_lea.vmem [#allocation3], %s266
        %p268 = pneg %p53
        %p269 = pneg %p50
        %p270 = pneg %p74
        %p271 = pneg %p71
        %p272 = pneg %p95
        %p273 = pneg %p92
        %p274 = pneg %p121
        %p275 = pneg %p118
        %p276 = scmp.lt.s32.totalorder %s25, 0
        %s277 = scalar_select %p276, %s25, 0
        %s278 = scalar_lea.vmem %s4, %s277
        %p279 = pneg %p147
        %p280 = pneg %p144
        %p281 = pneg %p175
        %p282 = pneg %p172
        %p283 = scmp.lt.s32.totalorder %s24, 1
        %s284 = scalar_select %p283, %s24, 1
        %p285 = scmp.lt.s32.totalorder %s25, 0
        %s286 = scalar_select %p285, %s25, 0
        %s287 = sadd.s32 %s286, %s284
        %s288 = smul.addr %s287, 8
        %s289 = scalar_lea.vmem %s5, %s288
        %p290 = scmp.lt.s32.totalorder %s25, 0
        %s291 = scalar_select %p290, %s25, 0
        %s292 = scalar_lea.vmem %s4, %s291
        %p293 = scmp.lt.s32.totalorder %s24, 1
        %s294 = scalar_select %p293, %s24, 1
        %p295 = scmp.lt.s32.totalorder %s25, 0
        %s296 = scalar_select %p295, %s25, 0
        %s297 = sadd.s32 %s296, %s294
        %s298 = smul.addr %s297, 8
        %s299 = scalar_lea.vmem %s5, %s298
        %p300 = scmp.eq.s32.totalorder %s25, 0
        // Predicated region
        $region49: #{prenorm_forward.1} parent=39 // pred_check
          %p301 = pneg %p300
        $region50: #{prenorm_forward.1} parent=39 // pred_check_branch
          %303 = sbr.rel (%p301) target = $region52
        $region51: #{prenorm_forward.1} parent=39 // pred_region
          %v304 = vld [vmem:[%s252] sm:$0xff]
          %vm305 = vcmask 261120
          %v306 = vsel %vm305, %v304, 0.0
          %307 = vadd.xlane.f32.xlu0 %v306
          %v308 = vpop.xlane.xlu0 %307
          %v309 = vrcp.pop 32.0
          %v310 = vmul.f32 32.0, %v309
          %v311 = vsub.f32 1.0, %v310
          %v312 = vmul.f32 %v309, %v311
          %v313 = vadd.f32 %v309, %v312
          %vm314 = vweird.f32 %v309
          %v315 = vsel %vm314, %v309, %v313
          %v316 = vmul.f32 %v308, %v315
          %v317 = vsub.f32 %v304, %v316
          %v318 = vmul.f32 %v317, %v317
          %v319 = vsel %vm305, %v318, 0.0
          %320 = vadd.xlane.f32.xlu0 %v319
          %v321 = vpop.xlane.xlu0 %320
          %v322 = vmul.f32 %v321, %v315
          %v323 = vadd.f32 %v322, 1e-05
          %v324 = vrsqrt.pop %v323
          %v325 = vmul.f32 %v324, %v323
          %v326 = vmul.f32 %v325, %v324
          %v327 = vmul.f32 0.5, %v326
          %v328 = vsub.f32 1.5, %v327
          %v329 = vmul.f32 %v324, %v328
          %vm330 = vweird.f32 %v323
          %vm331 = vweird.f32 %v324
          %vm332 = vmor %vm330, %vm331
          %v333 = vsel %vm332, %v324, %v329
          %v334 = vmul.f32 %v317, %v333
          %v335 = vld [vmem:[%s1] sm:$0x1]
          %v337 = vperm.slane %v335, 0
          %v339 = vmul.f32 %v334, %v337
          %v340 = vld [vmem:[%s2] sm:$0x1]
          %v342 = vperm.slane %v340, 0
          %v344 = vadd.f32 %v339, %v342
          %345 = vst.msk [vmem:[#allocation2] sm:$0xff] %vm305, %v344
        $region52: #{prenorm_forward.1} parent=39 // pred_fallthru
          _
        %v346 = vld [vmem:[#allocation2] sm:$0xff]
        %v347 = vld [vmem:[#allocation5] sm:$0xff]
        %v348 = vld [vmem:[#allocation5 + $0x8] sm:$0xff]
        %v349 = vld [vmem:[#allocation5 + $0x10] sm:$0xff]
        %v350 = vld [vmem:[#allocation5 + $0x18] sm:$0xff]
        %v351 = vld [vmem:[%s292] sm:$0x1]
        %v353 = vperm.slane %v351, 0
        %vm355 = vcmask 261120
        %v357 = vsel %vm355, %v346, 0
        %359 = vmatpush.msra.mxu0 0.0
        %360 = vmatpush.msra.mxu0 0.0
        %361 = vmatpush.msra.mxu0 0.0
        %362 = vmatpush.msra.mxu0 0.0
        %363 = vmatpush.msra.mxu0 0.0
        %364 = vmatpush.msra.mxu0 0.0
        %365 = vmatpush.msra.mxu0 0.0
        %366 = vmatpush.msra.mxu0 0.0
        %367 = vmatpush.msra.mxu0 0.0
        %368 = vmatpush.msra.mxu0 0.0
        %369 = vmatpush.msra.mxu0 0.0
        %370 = vmatpush.msra.mxu0 0.0
        %371 = vmatpush.msra.mxu0 %v350
        %372 = vmatpush.msra.mxu0 %v349
        %373 = vmatpush.msra.mxu0 %v348
        %374 = vmatpush.msra.mxu0 %v347
        %375 = vmatmul.f32.gmra.mxu0 %v357
        %v376 = vpop.f32.mrf.mxu0
        %v377 = vadd.f32 %v353, %v376
        %378 = vdwg.mxu0
        %379 = vst [vmem:[%s299] sm:$0xff] %v377
        %p380 = scmp.lt.s32.totalorder %s24, 1
        %s381 = scalar_select %p380, %s24, 1
        %p382 = scmp.lt.s32.totalorder %s25, 0
        %s383 = scalar_select %p382, %s25, 0
        %s384 = sadd.s32 %s383, %s381
        %s385 = smul.addr %s384, 8
        %s386 = scalar_lea.vmem %s5, %s385
        // Predicated region
        $region53: #{prenorm_forward.1} parent=39 // pred_check
          %p387 = pneg %p172
        $region54: #{prenorm_forward.1} parent=39 // pred_check_branch
          %389 = sbr.rel (%p387) target = $region56
        $region55: #{prenorm_forward.1} parent=39 // pred_region
          _
        $region56: #{prenorm_forward.1} parent=39 // pred_fallthru
          _
      $region40: #{prenorm_forward.1} parent=5 // pred_fallthru
        _
      %p390 = scmp.le.s32.totalorder 2, %s15
      // Predicated region
      $region57: #{prenorm_forward.1} parent=5 // pred_check
        %p391 = pneg %p390
      $region58: #{prenorm_forward.1} parent=5 // pred_check_branch
        %393 = sbr.rel (%p391) target = $region60
      $region59: #{prenorm_forward.1} parent=5 // pred_region
        %s394 = ssub.s32 %s15, 2
        // Predicated region
        $region61: #{prenorm_forward.1} parent=59 // pred_check
          %p395 = pneg %p178
        $region62: #{prenorm_forward.1} parent=59 // pred_check_branch
          %397 = sbr.rel (%p395) target = $region64
        $region63: #{prenorm_forward.1} parent=59 // pred_region
          %p398 = scmp.lt.s32.totalorder %s26, 1
          %s399 = scalar_select %p398, %s26, 1
          %p400 = scmp.lt.s32.totalorder %s27, 0
          %s401 = scalar_select %p400, %s27, 0
          %s402 = sadd.s32 %s401, %s399
          %s403 = smul.addr %s402, 8
          %s404 = scalar_lea.vmem %s5, %s403
        $region64: #{prenorm_forward.1} parent=59 // pred_fallthru
          _
      $region60: #{prenorm_forward.1} parent=5 // pred_fallthru
        _
    $region6: #{prenorm_forward.1} parent=1 // loop_footer
      %s19 = sadd.s32 1, %s15
    $region7: #{prenorm_forward.1} parent=1 // loop_footer_branch
      %14 = sbr.rel target = $region3
    $region8: #{prenorm_forward.1} parent=1 // loop_exit
      _
    %405 = vsyncpa [#allocation4], 1
    %s406 = scalar_lea.sflag [#allocation4], 1
    %407 = vsyncpa %s406, 1
    %408 = vsyncpa [#allocation6], 1

</llo_original>
